<compile_context>
chip_gen: v6e
topology: v6e:2x2x1
jax: 0.10.0
libtpu: 0.0.40
codegen_flags: <defaults>
</compile_context>

<pallas_src>
import functools

import jax
import jax.numpy as jnp
from jax.experimental import pallas as pl
from jax.experimental.pallas import tpu as pltpu

EPS = 1e-5  # PyTorch BatchNorm1d default eps


# ----------------------------------------------------------------------------
# Fused kernel: (1x1 conv [bias folded] + ReLU + per-batch avg-pool partials)
# accumulated over spatial tiles, then Linear + BatchNorm1d head on last step.
# ----------------------------------------------------------------------------
def _fused_net_kernel(x_ref, pool_ref, waug_ref, wfc_ref, gamma_ref, beta_ref,
                      out_ref, feat_acc_ref, *, inv_hw):
    # x_ref:        (1, C_in+1, B*hw_tile)  bf16 image slab (ones channel = bias)
    # pool_ref:     (1, B*hw_tile, B)       f32 block-diag 0/1 pooling matrix
    #                                       (ragged-tail mask folded in)
    # waug_ref:     (F, C_in+1)             bf16 conv weight with bias column
    # wfc_ref:      (C, F)                  bf16 FC weight, PyTorch layout
    # gamma_ref:    (C, 1)  beta_ref: (C, 1) f32 BN affine params
    # out_ref:      (C, B)                  f32 logits (written once, last step)
    # feat_acc_ref: (F, B)                  f32 VMEM running sum of activations
    k = pl.program_id(0)

    @pl.when(k == 0)
    def _init():
        feat_acc_ref[...] = jnp.zeros_like(feat_acc_ref)

    # Backbone stand-in: one batched MXU matmul over the whole (B*hw_tile) slab
    # (bias folded into the augmented contraction), then ReLU on the VPU.
    y = jnp.dot(waug_ref[...], x_ref[0],
                preferred_element_type=jnp.float32)            # (F, B*hw_tile)
    y = jnp.maximum(y, 0.0)

    # Per-batch global-average-pool partial sums via a second (slack-MXU)
    # matmul against the block-diagonal pooling matrix; padded columns are
    # zeroed by the pooling matrix.  Single dense (F, B) RMW per grid step.
    feat_acc_ref[...] += jnp.dot(y, pool_ref[0],
                                 preferred_element_type=jnp.float32)  # (F, B)

    @pl.when(k == pl.num_programs(0) - 1)
    def _head():
        feat = feat_acc_ref[...] * inv_hw                      # (F, B) avg pool
        logits = jnp.dot(wfc_ref[...], feat.astype(jnp.bfloat16),
                         preferred_element_type=jnp.float32)   # (C, B)
        # NOTE: Linear bias omitted -- cancelled exactly by the batch-mean
        # subtraction of the training-mode BatchNorm below.
        mean = jnp.mean(logits, axis=-1, keepdims=True)        # (C, 1) over batch
        centered = logits - mean                               # two-pass variance
        var = jnp.mean(centered * centered, axis=-1, keepdims=True)
        scale = gamma_ref[...] * jax.lax.rsqrt(var + EPS)
        out_ref[...] = centered * scale + beta_ref[...]


# ----------------------------------------------------------------------------
# Generation-aware tile / VMEM budgeting
# ----------------------------------------------------------------------------
def _round_up(x, m):
    return ((x + m - 1) // m) * m


def _vmem_capacity_bytes():
    try:
        return int(pltpu.get_tpu_info().vmem_capacity_bytes)
    except Exception:
        return 64 << 20  # conservative: v7x has 64 MiB per TensorCore


def _pick_hw_tile(feat_dim, batch, num_cls, vmem_cap):
    """Largest MXU-friendly spatial tile whose per-step VMEM footprint fits."""
    budget = min(int(vmem_cap * 0.6), 96 << 20)
    lane = 128
    fixed = (feat_dim * lane * 4                       # (F, B) f32 accumulator
             + 2 * feat_dim * lane * 2                 # (F, C_in+1) bf16 weight, 2 bufs
             + 2 * num_cls * max(feat_dim, lane) * 2   # (C, F) bf16 fc weight, 2 bufs
             + 4 * num_cls * lane * 4)                 # gamma/beta (C, 1) f32, 2 bufs

    def per_step(t):
        return (feat_dim * batch * t * 4               # (F, B*t) f32 activation slab
                + 2 * 8 * batch * t * 2                # (C_in+1 -> 8, B*t) bf16 input, 2 bufs
                + 2 * batch * t * lane * 4)            # (B*t, B -> 128) f32 pool, 2 bufs

    for t in (2048, 1024, 512, 256):   # multiples of 256: full MXU width on v6e/v7x
        if fixed + per_step(t) <= budget:
            return t
    return 128                          # last resort (fine on v5e's 128-wide MXU)


# ----------------------------------------------------------------------------
# Parameter prep + forward
# ----------------------------------------------------------------------------
def prepare_params(w_conv, b_conv, w_fc, b_fc, gamma, beta):
    """One-time parameter preprocessing (layout + dtype), outside the hot path."""
    del b_fc  # exactly cancelled by training-mode BatchNorm mean subtraction
    w_aug = jnp.concatenate([w_conv, b_conv.reshape(-1, 1)], axis=1)  # fold bias
    return {
        "w_aug": w_aug.astype(jnp.bfloat16),               # (F, C_in+1) bf16
        "w_fc": w_fc.astype(jnp.bfloat16),                 # (C, F) bf16 (halves resident VMEM)
        "gamma": gamma.reshape(-1, 1).astype(jnp.float32),  # (C, 1)
        "beta": beta.reshape(-1, 1).astype(jnp.float32),    # (C, 1)
    }


def net_forward(image, params, hw_tile=None):
    B, C_in, H, W = image.shape
    HW = H * W
    F, K = params["w_aug"].shape          # K = C_in + 1 (bias channel)
    C = params["w_fc"].shape[0]

    vmem_cap = _vmem_capacity_bytes()
    if hw_tile is None:
        hw_tile = _pick_hw_tile(F, B, C, vmem_cap)
    # never tile wider than the (256-rounded) spatial extent; keep >= 128 lanes
    hw_tile = max(128, min(hw_tile, _round_up(HW, 256)))
    hw_pad = _round_up(HW, hw_tile)
    n_tiles = hw_pad // hw_tile
    bt = B * hw_tile

    # One-time host-side prep (cheap XLA ops; the wide spatial axis stays on
    # lanes).  bf16 cast halves the input HBM read; the ones channel folds the
    # conv bias into the matmul; zero padding makes the last tile full-width.
    x = image.reshape(B, C_in, HW).astype(jnp.bfloat16)
    x = jnp.concatenate([x, jnp.ones((B, 1, HW), jnp.bfloat16)], axis=1)   # (B, K, HW)
    x = jnp.pad(x, ((0, 0), (0, 0), (0, hw_pad - HW)))
    x = x.reshape(B, K, n_tiles, hw_tile).transpose(2, 1, 0, 3).reshape(n_tiles, K, bt)

    # Block-diagonal pooling matrix with the ragged-tail mask folded in:
    # pool[t, b*hw_tile + h, b'] = (b == b') * (t*hw_tile + h < HW)
    hidx = jnp.arange(n_tiles)[:, None] * hw_tile + jnp.arange(hw_tile)[None, :]
    valid = (hidx < HW).astype(jnp.float32)                                # (nt, hw_tile)
    pool = jnp.einsum("bk,th->tbhk", jnp.eye(B, dtype=jnp.float32), valid)
    pool = pool.reshape(n_tiles, bt, B)                                    # (nt, B*hw_tile, B)

    logits_t = pl.pallas_call(
        functools.partial(_fused_net_kernel, inv_hw=1.0 / HW),
        out_shape=jax.ShapeDtypeStruct((C, B), jnp.float32),
        grid=(n_tiles,),
        in_specs=[
            pl.BlockSpec((1, K, bt), lambda k: (k, 0, 0)),     # image slab
            pl.BlockSpec((1, bt, B), lambda k: (k, 0, 0)),     # pooling matrix
            pl.BlockSpec((F, K), lambda k: (0, 0)),            # conv weight (+bias col)
            pl.BlockSpec((C, F), lambda k: (0, 0)),            # fc weight
            pl.BlockSpec((C, 1), lambda k: (0, 0)),            # gamma
            pl.BlockSpec((C, 1), lambda k: (0, 0)),            # beta
        ],
        out_specs=pl.BlockSpec((C, B), lambda k: (0, 0)),
        scratch_shapes=[pltpu.VMEM((F, B), jnp.float32)],
        compiler_params=pltpu.CompilerParams(
            dimension_semantics=("arbitrary",),                # carried reduction
            vmem_limit_bytes=int(min(vmem_cap * 3 // 4, 100 << 20))),
    )(x, pool, params["w_aug"], params["w_fc"], params["gamma"], params["beta"])

    return logits_t.T  # (B, num_cls); one tiny (C, B) transpose outside the kernel


# ----------------------------------------------------------------------------
# Pure-JAX reference (mirrors the kernel math, incl. bf16 matmul operands)
# ----------------------------------------------------------------------------
def net_reference(image, params):
    B, C_in, H, W = image.shape
    HW = H * W
    x = image.reshape(B, C_in, HW).astype(jnp.bfloat16)
    x_aug = jnp.concatenate([x, jnp.ones((B, 1, HW), jnp.bfloat16)], axis=1)
    act = jnp.einsum("fk,bkh->bfh", params["w_aug"], x_aug,
                     preferred_element_type=jnp.float32)      # (B, F, HW)
    act = jnp.maximum(act, 0.0)
    feat = jnp.mean(act, axis=-1)                             # (B, F)
    logits = jnp.dot(feat.astype(jnp.bfloat16), params["w_fc"].T,
                     preferred_element_type=jnp.float32)      # (B, C)
    mean = jnp.mean(logits, axis=0, keepdims=True)
    var = jnp.mean((logits - mean) ** 2, axis=0, keepdims=True)  # biased, training-mode
    y_hat = (logits - mean) * jax.lax.rsqrt(var + EPS)
    return y_hat * params["gamma"][:, 0] + params["beta"][:, 0]


if __name__ == "__main__":
    key = jax.random.PRNGKey(0)
    # HW = 18*16 = 288 is NOT a multiple of 128 -> exercises the zero-pad +
    # masked (ragged) last tile path.
    B, C_IN, H, W = 4, 3, 18, 16
    FEAT = 32                       # stand-in for resnet.fc.in_features (2048)
    NUM_CLS = 8                     # args.num_cls

    k = jax.random.split(key, 5)
    image = jax.random.normal(k[0], (B, C_IN, H, W), jnp.float32)

    raw = {
        # backbone stand-in (deterministic synthetic weights), (F, C_in) layout
        "w_conv": 0.1 * jax.random.normal(k[1], (FEAT, C_IN), jnp.float32),
        "b_conv": 0.1 * jax.random.normal(k[2], (FEAT,), jnp.float32),
        # fc = Linear(FEAT, NUM_CLS): PyTorch weight layout (out, in)
        "w_fc": (1.0 / FEAT ** 0.5)
                * jax.random.normal(k[3], (NUM_CLS, FEAT), jnp.float32),
        "b_fc": 0.1 * jax.random.normal(k[4], (NUM_CLS,), jnp.float32),
        # BatchNorm1d default init: gamma=1, beta=0
        "gamma": jnp.ones((NUM_CLS,), jnp.float32),
        "beta": jnp.zeros((NUM_CLS,), jnp.float32),
    }
    params = prepare_params(raw["w_conv"], raw["b_conv"], raw["w_fc"],
                            raw["b_fc"], raw["gamma"], raw["beta"])

    ref = net_reference(image, params)

    # (1) hw_tile=128 forces 3 grid steps (288 -> padded 384) so the carried
    #     accumulator and the ragged-tail pooling mask are both exercised.
    logits = net_forward(image, params, hw_tile=128)
    jax.block_until_ready(logits)
    assert logits.shape == (B, NUM_CLS) and logits.dtype == jnp.float32
    assert jnp.allclose(logits, ref, atol=2e-2, rtol=2e-2), (
        f"max abs err {float(jnp.max(jnp.abs(logits - ref)))}")

    # (2) auto (generation-aware) tile selection: single-step path.
    logits_auto = net_forward(image, params)
    jax.block_until_ready(logits_auto)
    assert jnp.allclose(logits_auto, ref, atol=2e-2, rtol=2e-2), (
        f"max abs err {float(jnp.max(jnp.abs(logits_auto - ref)))}")

    print("KERNEL_OK")
</pallas_src>

<mosaic_0001>
module attributes {stable_mosaic.version = 11 : i64} {
  func.func @_fused_net_kernel(%arg0: i32, %arg1: memref<1x4x512xbf16, #tpu.memory_space<vmem>>, %arg2: memref<1x512x4xf32, #tpu.memory_space<vmem>>, %arg3: memref<32x4xbf16, #tpu.memory_space<vmem>>, %arg4: memref<8x32xbf16, #tpu.memory_space<vmem>>, %arg5: memref<8x1xf32, #tpu.memory_space<vmem>>, %arg6: memref<8x1xf32, #tpu.memory_space<vmem>>, %arg7: memref<8x4xf32, #tpu.memory_space<vmem>>, %arg8: memref<32x4xf32, #tpu.memory_space<vmem>>) attributes {dimension_semantics = [#tpu.dimension_semantics<arbitrary>], iteration_bounds = array<i64: 3>, scalar_prefetch = 0 : i64, scratch_operands = 1 : i64, tpu.core_type = #tpu.core_type<tc>, window_params = [{transform_indices = @transform_0, window_bounds = array<i64: 1, 4, 512>}, {transform_indices = @transform_1, window_bounds = array<i64: 1, 512, 4>}, {pipeline_mode = #tpu.pipeline_mode<synchronous>, transform_indices = @transform_2, window_bounds = array<i64: 32, 4>}, {pipeline_mode = #tpu.pipeline_mode<synchronous>, transform_indices = @transform_3, window_bounds = array<i64: 8, 32>}, {pipeline_mode = #tpu.pipeline_mode<synchronous>, transform_indices = @transform_4, window_bounds = array<i64: 8, 1>}, {pipeline_mode = #tpu.pipeline_mode<synchronous>, transform_indices = @transform_5, window_bounds = array<i64: 8, 1>}, {pipeline_mode = #tpu.pipeline_mode<synchronous>, transform_indices = @transform_6, window_bounds = array<i64: 8, 4>}]} {
    %c0_i32 = arith.constant 0 : i32
    %0 = arith.cmpi eq, %arg0, %c0_i32 : i32
    %1 = arith.extui %0 : i1 to i32
    %c0_i32_0 = arith.constant 0 : i32
    %2 = arith.cmpi ne, %1, %c0_i32_0 : i32
    scf.if %2 {
      %cst_15 = arith.constant 0.000000e+00 : f32
      %18 = vector.broadcast %cst_15 : f32 to vector<32x4xf32>
      %c0_16 = arith.constant 0 : index
      %c0_17 = arith.constant 0 : index
      %19 = vector.load %arg8[%c0_16, %c0_17] : memref<32x4xf32, #tpu.memory_space<vmem>>, vector<32x4xf32>
      tpu.vector_store %arg8[%c0_16, %c0_17], %18 {strides = array<i32>} : memref<32x4xf32, #tpu.memory_space<vmem>>, vector<32x4xf32>,
    } else {
    }
    %c0 = arith.constant 0 : index
    %c0_1 = arith.constant 0 : index
    %3 = vector.load %arg3[%c0, %c0_1] : memref<32x4xbf16, #tpu.memory_space<vmem>>, vector<32x4xbf16>
    %c0_2 = arith.constant 0 : index
    %c0_3 = arith.constant 0 : index
    %c0_4 = arith.constant 0 : index
    %4 = vector.load %arg1[%c0_2, %c0_3, %c0_4] : memref<1x4x512xbf16, #tpu.memory_space<vmem>>, vector<1x4x512xbf16>
    %5 = vector.shape_cast %4 : vector<1x4x512xbf16> to vector<4x512xbf16>
    %cst = arith.constant dense<0.000000e+00> : vector<32x512xf32>
    %6 = tpu.matmul %3, %5, %cst {dimension_numbers = #tpu.dot_dimension_numbers<[1], [0], [0], [1], [0, 0, 1, 1], [], []>} : vector<32x4xbf16>, vector<4x512xbf16>, vector<32x512xf32> -> vector<32x512xf32>
    %cst_5 = arith.constant 0.000000e+00 : f32
    %7 = vector.broadcast %cst_5 : f32 to vector<32x512xf32>
    %8 = arith.maximumf %6, %7 : vector<32x512xf32>
    %c0_6 = arith.constant 0 : index
    %c0_7 = arith.constant 0 : index
    %9 = vector.load %arg8[%c0_6, %c0_7] : memref<32x4xf32, #tpu.memory_space<vmem>>, vector<32x4xf32>
    %c0_8 = arith.constant 0 : index
    %c0_9 = arith.constant 0 : index
    %c0_10 = arith.constant 0 : index
    %10 = vector.load %arg2[%c0_8, %c0_9, %c0_10] : memref<1x512x4xf32, #tpu.memory_space<vmem>>, vector<1x512x4xf32>
    %11 = vector.shape_cast %10 : vector<1x512x4xf32> to vector<512x4xf32>
    %cst_11 = arith.constant dense<0.000000e+00> : vector<32x4xf32>
    %12 = tpu.matmul %8, %11, %cst_11 {dimension_numbers = #tpu.dot_dimension_numbers<[1], [0], [0], [1], [0, 0, 1, 1], [], []>} : vector<32x512xf32>, vector<512x4xf32>, vector<32x4xf32> -> vector<32x4xf32>
    %13 = arith.addf %9, %12 : vector<32x4xf32>
    %c0_12 = arith.constant 0 : index
    %c0_13 = arith.constant 0 : index
    %14 = vector.load %arg8[%c0_12, %c0_13] : memref<32x4xf32, #tpu.memory_space<vmem>>, vector<32x4xf32>
    tpu.vector_store %arg8[%c0_12, %c0_13], %13 {strides = array<i32>} : memref<32x4xf32, #tpu.memory_space<vmem>>, vector<32x4xf32>,
    %c2_i32 = arith.constant 2 : i32
    %15 = arith.cmpi eq, %arg0, %c2_i32 : i32
    %16 = arith.extui %15 : i1 to i32
    %c0_i32_14 = arith.constant 0 : i32
    %17 = arith.cmpi ne, %16, %c0_i32_14 : i32
    scf.if %17 {
      %c0_15 = arith.constant 0 : index
      %c0_16 = arith.constant 0 : index
      %18 = vector.load %arg8[%c0_15, %c0_16] : memref<32x4xf32, #tpu.memory_space<vmem>>, vector<32x4xf32>
      %cst_17 = arith.constant 0.00347222225 : f32
      %19 = vector.broadcast %cst_17 : f32 to vector<32x4xf32>
      %20 = arith.mulf %18, %19 : vector<32x4xf32>
      %c0_18 = arith.constant 0 : index
      %c0_19 = arith.constant 0 : index
      %21 = vector.load %arg4[%c0_18, %c0_19] : memref<8x32xbf16, #tpu.memory_space<vmem>>, vector<8x32xbf16>
      %22 = arith.truncf %20 : vector<32x4xf32> to vector<32x4xbf16>
      %cst_20 = arith.constant dense<0.000000e+00> : vector<8x4xf32>
      %23 = tpu.matmul %21, %22, %cst_20 {dimension_numbers = #tpu.dot_dimension_numbers<[1], [0], [0], [1], [0, 0, 1, 1], [], []>} : vector<8x32xbf16>, vector<32x4xbf16>, vector<8x4xf32> -> vector<8x4xf32>
      %cst_21 = arith.constant dense<0.000000e+00> : vector<8xf32>
      %24 = vector.multi_reduction <add>, %23, %cst_21 [1] : vector<8x4xf32> to vector<8xf32>
      %25 = vector.shape_cast %24 : vector<8xf32> to vector<8x1xf32>
      %cst_22 = arith.constant 4.000000e+00 : f32
      %26 = vector.broadcast %cst_22 : f32 to vector<8x1xf32>
      %27 = arith.divf %25, %26 : vector<8x1xf32>
      %28 = vector.broadcast %27 : vector<8x1xf32> to vector<8x4xf32>
      %29 = arith.subf %23, %28 : vector<8x4xf32>
      %30 = arith.mulf %29, %29 : vector<8x4xf32>
      %cst_23 = arith.constant dense<0.000000e+00> : vector<8xf32>
      %31 = vector.multi_reduction <add>, %30, %cst_23 [1] : vector<8x4xf32> to vector<8xf32>
      %32 = vector.shape_cast %31 : vector<8xf32> to vector<8x1xf32>
      %cst_24 = arith.constant 4.000000e+00 : f32
      %33 = vector.broadcast %cst_24 : f32 to vector<8x1xf32>
      %34 = arith.divf %32, %33 : vector<8x1xf32>
      %c0_25 = arith.constant 0 : index
      %c0_26 = arith.constant 0 : index
      %35 = vector.load %arg5[%c0_25, %c0_26] : memref<8x1xf32, #tpu.memory_space<vmem>>, vector<8x1xf32>
      %cst_27 = arith.constant 9.99999974E-6 : f32
      %36 = vector.broadcast %cst_27 : f32 to vector<8x1xf32>
      %37 = arith.addf %34, %36 : vector<8x1xf32>
      %38 = math.rsqrt %37 : vector<8x1xf32>
      %39 = arith.mulf %35, %38 : vector<8x1xf32>
      %40 = vector.broadcast %39 : vector<8x1xf32> to vector<8x4xf32>
      %41 = arith.mulf %29, %40 : vector<8x4xf32>
      %c0_28 = arith.constant 0 : index
      %c0_29 = arith.constant 0 : index
      %42 = vector.load %arg6[%c0_28, %c0_29] : memref<8x1xf32, #tpu.memory_space<vmem>>, vector<8x1xf32>
      %43 = vector.broadcast %42 : vector<8x1xf32> to vector<8x4xf32>
      %44 = arith.addf %41, %43 : vector<8x4xf32>
      %c0_30 = arith.constant 0 : index
      %c0_31 = arith.constant 0 : index
      %45 = vector.load %arg7[%c0_30, %c0_31] : memref<8x4xf32, #tpu.memory_space<vmem>>, vector<8x4xf32>
      tpu.vector_store %arg7[%c0_30, %c0_31], %44 {strides = array<i32>} : memref<8x4xf32, #tpu.memory_space<vmem>>, vector<8x4xf32>,
    } else {
    }
    return
  }
  func.func @transform_0(%arg0: i32) -> (i32, i32, i32) {
    %c0_i32 = arith.constant 0 : i32
    %c0_i32_0 = arith.constant 0 : i32
    %c0_i32_1 = arith.constant 0 : i32
    return %arg0, %c0_i32, %c0_i32_0 : i32, i32, i32
  }
  func.func @transform_1(%arg0: i32) -> (i32, i32, i32) {
    %c0_i32 = arith.constant 0 : i32
    %c0_i32_0 = arith.constant 0 : i32
    %c0_i32_1 = arith.constant 0 : i32
    return %arg0, %c0_i32, %c0_i32_0 : i32, i32, i32
  }
  func.func @transform_2(%arg0: i32) -> (i32, i32) {
    %c0_i32 = arith.constant 0 : i32
    %c0_i32_0 = arith.constant 0 : i32
    %c0_i32_1 = arith.constant 0 : i32
    return %c0_i32, %c0_i32_0 : i32, i32
  }
  func.func @transform_3(%arg0: i32) -> (i32, i32) {
    %c0_i32 = arith.constant 0 : i32
    %c0_i32_0 = arith.constant 0 : i32
    %c0_i32_1 = arith.constant 0 : i32
    return %c0_i32, %c0_i32_0 : i32, i32
  }
  func.func @transform_4(%arg0: i32) -> (i32, i32) {
    %c0_i32 = arith.constant 0 : i32
    %c0_i32_0 = arith.constant 0 : i32
    %c0_i32_1 = arith.constant 0 : i32
    return %c0_i32, %c0_i32_0 : i32, i32
  }
  func.func @transform_5(%arg0: i32) -> (i32, i32) {
    %c0_i32 = arith.constant 0 : i32
    %c0_i32_0 = arith.constant 0 : i32
    %c0_i32_1 = arith.constant 0 : i32
    return %c0_i32, %c0_i32_0 : i32, i32
  }
  func.func @transform_6(%arg0: i32) -> (i32, i32) {
    %c0_i32 = arith.constant 0 : i32
    %c0_i32_0 = arith.constant 0 : i32
    %c0_i32_1 = arith.constant 0 : i32
    return %c0_i32, %c0_i32_0 : i32, i32
  }
}

</mosaic_0001>

<llo_original>
// kernel: tpu_custom_call.1
$region0: #{tpu_custom_call.1}
  #allocation0 [shape = 'u32[]', space=smem, size = 0x4, offset = 0x4, fixed_abs, tag = 'smem constant byte address 0x4 - core index']
  #allocation1 [shape = 'u32[144,128]{1,0:T(1,128)}', space=vmem, size = 0x12000, scoped, tag = 'internal scratch']
  #allocation2 [shape = 'f32[32,4]{1,0:T(8,128)}', space=vmem, size = 0x4000, scoped, tag = 'scratch operand']
  %s0 = inlined_call_operand.vmem [shape: bf16[3,4,512], index: 0, kind: input, shape index: {}]
  %s1 = inlined_call_operand.vmem [shape: f32[3,512,4], index: 1, kind: input, shape index: {}]
  %s2 = inlined_call_operand.vmem [shape: bf16[32,4], index: 2, kind: input, shape index: {}]
  %s3 = inlined_call_operand.vmem [shape: bf16[8,32], index: 3, kind: input, shape index: {}]
  %s4 = inlined_call_operand.vmem [shape: f32[8,1], index: 4, kind: input, shape index: {}]
  %s5 = inlined_call_operand.vmem [shape: f32[8,1], index: 5, kind: input, shape index: {}]
  %s6 = inlined_call_operand.vmem [shape: f32[8,4], index: 6, kind: output, shape index: {}]
  %s7 = sld [smem:[#allocation0]]
  $region65: #{tpu_custom_call.1} parent=0
    _
  %s9 = ssub.s32 1, %s7
  %s10 = scalar_select 0, %s9, %s7
  loop: start=0, step=1, limit=5
  $region2: #{tpu_custom_call.1} parent=0 // loop_pre_header
    _
  $region3: #{tpu_custom_call.1} parent=0 // loop_header
    %s12 = sphi 0, %s16
    %p13 = scmp.ge.s32.totalorder %s12, 5
    %s22 = sphi 0, %s24
    %s25 = sphi 0, %s22
    %s26 = sphi 0, %s25
    %s42 = sphi 0, %s26
    %s48 = sphi 0, %s50
    %s51 = sphi 0, %s48
    %s52 = sphi 0, %s51
    %s68 = sphi 0, %s52
    %s72 = sphi 0, %s72
    %s74 = sphi 0, %s72
    %s75 = sphi 0, %s74
    %s89 = sphi 0, %s75
    %s93 = sphi 0, %s93
    %s95 = sphi 0, %s93
    %s96 = sphi 0, %s95
    %s110 = sphi 0, %s96
    %s114 = sphi 0, %s114
    %s116 = sphi 0, %s114
    %s117 = sphi 0, %s116
    %s131 = sphi 0, %s117
    %s135 = sphi 0, %s135
    %s137 = sphi 0, %s135
    %s138 = sphi 0, %s137
    %s152 = sphi 0, %s138
    %s156 = sphi 0, %s156
    %s158 = sphi 0, %s156
    %s159 = sphi 0, %s158
    %s173 = sphi 0, %s159
  $region4: #{tpu_custom_call.1} parent=0 // loop_header_branch
    %15 = sbr.rel (%p13) target = $region8
  $region5: #{tpu_custom_call.1} parent=0 // loop_body
    %s17 = ssub.s32 %s12, 1
    %s18 = ssub.s32 %s12, 2
    %s19 = sadd.s32 %s12, 1
    %s20 = ssub.s32 %s12, %s19
    %p21 = scmp.eq.s32.totalorder %s20, 0
    %s23 = sadd.s32 %s22, 1
    %s24 = scalar_select %p21, %s22, %s23
    %p27 = pneg %p21
    %p28 = scmp.eq.s32.totalorder %s12, 2
    %p29 = por %p27, %p28
    %p30 = scmp.ne.s32.totalorder %s22, %s25
    %p31 = scmp.eq.s32.totalorder %s12, 0
    %p32 = por %p30, %p31
    %p33 = scmp.ne.s32.totalorder %s22, %s25
    %p34 = scmp.eq.s32.totalorder %s17, 2
    %p35 = por %p33, %p34
    %p36 = scmp.ne.s32.totalorder %s25, %s26
    %p37 = scmp.eq.s32.totalorder %s17, 0
    %p38 = por %p36, %p37
    %p39 = scmp.ne.s32.totalorder %s25, %s26
    %p40 = scmp.eq.s32.totalorder %s18, 2
    %p41 = por %p39, %p40
    %p43 = scmp.ne.s32.totalorder %s26, %s42
    %p44 = scmp.eq.s32.totalorder %s18, 0
    %p45 = por %p43, %p44
    %s46 = ssub.s32 %s12, %s19
    %p47 = scmp.eq.s32.totalorder %s46, 0
    %s49 = sadd.s32 %s48, 1
    %s50 = scalar_select %p47, %s48, %s49
    %p53 = pneg %p47
    %p54 = scmp.eq.s32.totalorder %s12, 2
    %p55 = por %p53, %p54
    %p56 = scmp.ne.s32.totalorder %s48, %s51
    %p57 = scmp.eq.s32.totalorder %s12, 0
    %p58 = por %p56, %p57
    %p59 = scmp.ne.s32.totalorder %s48, %s51
    %p60 = scmp.eq.s32.totalorder %s17, 2
    %p61 = por %p59, %p60
    %p62 = scmp.ne.s32.totalorder %s51, %s52
    %p63 = scmp.eq.s32.totalorder %s17, 0
    %p64 = por %p62, %p63
    %p65 = scmp.ne.s32.totalorder %s51, %s52
    %p66 = scmp.eq.s32.totalorder %s18, 2
    %p67 = por %p65, %p66
    %p69 = scmp.ne.s32.totalorder %s52, %s68
    %p70 = scmp.eq.s32.totalorder %s18, 0
    %p71 = por %p69, %p70
    %s73 = sadd.s32 %s72, 1
    %p76 = scmp.eq.s32.totalorder %s12, 2
    %p77 = scmp.ne.s32.totalorder %s72, %s74
    %p78 = scmp.eq.s32.totalorder %s12, 0
    %p79 = por %p77, %p78
    %p80 = scmp.ne.s32.totalorder %s72, %s74
    %p81 = scmp.eq.s32.totalorder %s17, 2
    %p82 = por %p80, %p81
    %p83 = scmp.ne.s32.totalorder %s74, %s75
    %p84 = scmp.eq.s32.totalorder %s17, 0
    %p85 = por %p83, %p84
    %p86 = scmp.ne.s32.totalorder %s74, %s75
    %p87 = scmp.eq.s32.totalorder %s18, 2
    %p88 = por %p86, %p87
    %p90 = scmp.ne.s32.totalorder %s75, %s89
    %p91 = scmp.eq.s32.totalorder %s18, 0
    %p92 = por %p90, %p91
    %s94 = sadd.s32 %s93, 1
    %p97 = scmp.eq.s32.totalorder %s12, 2
    %p98 = scmp.ne.s32.totalorder %s93, %s95
    %p99 = scmp.eq.s32.totalorder %s12, 0
    %p100 = por %p98, %p99
    %p101 = scmp.ne.s32.totalorder %s93, %s95
    %p102 = scmp.eq.s32.totalorder %s17, 2
    %p103 = por %p101, %p102
    %p104 = scmp.ne.s32.totalorder %s95, %s96
    %p105 = scmp.eq.s32.totalorder %s17, 0
    %p106 = por %p104, %p105
    %p107 = scmp.ne.s32.totalorder %s95, %s96
    %p108 = scmp.eq.s32.totalorder %s18, 2
    %p109 = por %p107, %p108
    %p111 = scmp.ne.s32.totalorder %s96, %s110
    %p112 = scmp.eq.s32.totalorder %s18, 0
    %p113 = por %p111, %p112
    %s115 = sadd.s32 %s114, 1
    %p118 = scmp.eq.s32.totalorder %s12, 2
    %p119 = scmp.ne.s32.totalorder %s114, %s116
    %p120 = scmp.eq.s32.totalorder %s12, 0
    %p121 = por %p119, %p120
    %p122 = scmp.ne.s32.totalorder %s114, %s116
    %p123 = scmp.eq.s32.totalorder %s17, 2
    %p124 = por %p122, %p123
    %p125 = scmp.ne.s32.totalorder %s116, %s117
    %p126 = scmp.eq.s32.totalorder %s17, 0
    %p127 = por %p125, %p126
    %p128 = scmp.ne.s32.totalorder %s116, %s117
    %p129 = scmp.eq.s32.totalorder %s18, 2
    %p130 = por %p128, %p129
    %p132 = scmp.ne.s32.totalorder %s117, %s131
    %p133 = scmp.eq.s32.totalorder %s18, 0
    %p134 = por %p132, %p133
    %s136 = sadd.s32 %s135, 1
    %p139 = scmp.eq.s32.totalorder %s12, 2
    %p140 = scmp.ne.s32.totalorder %s135, %s137
    %p141 = scmp.eq.s32.totalorder %s12, 0
    %p142 = por %p140, %p141
    %p143 = scmp.ne.s32.totalorder %s135, %s137
    %p144 = scmp.eq.s32.totalorder %s17, 2
    %p145 = por %p143, %p144
    %p146 = scmp.ne.s32.totalorder %s137, %s138
    %p147 = scmp.eq.s32.totalorder %s17, 0
    %p148 = por %p146, %p147
    %p149 = scmp.ne.s32.totalorder %s137, %s138
    %p150 = scmp.eq.s32.totalorder %s18, 2
    %p151 = por %p149, %p150
    %p153 = scmp.ne.s32.totalorder %s138, %s152
    %p154 = scmp.eq.s32.totalorder %s18, 0
    %p155 = por %p153, %p154
    %s157 = sadd.s32 %s156, 1
    %p160 = scmp.eq.s32.totalorder %s12, 2
    %p161 = scmp.ne.s32.totalorder %s156, %s158
    %p162 = scmp.eq.s32.totalorder %s12, 0
    %p163 = por %p161, %p162
    %p164 = scmp.ne.s32.totalorder %s156, %s158
    %p165 = scmp.eq.s32.totalorder %s17, 2
    %p166 = por %p164, %p165
    %p167 = scmp.ne.s32.totalorder %s158, %s159
    %p168 = scmp.eq.s32.totalorder %s17, 0
    %p169 = por %p167, %p168
    %p170 = scmp.ne.s32.totalorder %s158, %s159
    %p171 = scmp.eq.s32.totalorder %s18, 2
    %p172 = por %p170, %p171
    %p174 = scmp.ne.s32.totalorder %s159, %s173
    %p175 = scmp.eq.s32.totalorder %s18, 0
    %p176 = por %p174, %p175
    %p177 = scmp.le.s32.totalorder 1, %s12
    %p178 = scmp.lt.s32.totalorder %s12, 4
    %p179 = pnand %p177, %p178
    %p180 = pneg %p179
    // Predicated region
    $region9: #{tpu_custom_call.1} parent=5 // pred_check
      _
    $region10: #{tpu_custom_call.1} parent=5 // pred_check_branch
      %182 = sbr.rel (%p179) target = $region12
    $region11: #{tpu_custom_call.1} parent=5 // pred_region
      %s183 = ssub.s32 %s12, 1
      // Predicated region
      $region13: #{tpu_custom_call.1} parent=11 // pred_check
        %p184 = pneg %p85
      $region14: #{tpu_custom_call.1} parent=11 // pred_check_branch
        %186 = sbr.rel (%p184) target = $region16
      $region15: #{tpu_custom_call.1} parent=11 // pred_region
        _
      $region16: #{tpu_custom_call.1} parent=11 // pred_fallthru
        _
      // Predicated region
      $region17: #{tpu_custom_call.1} parent=11 // pred_check
        %p187 = pneg %p106
      $region18: #{tpu_custom_call.1} parent=11 // pred_check_branch
        %189 = sbr.rel (%p187) target = $region20
      $region19: #{tpu_custom_call.1} parent=11 // pred_region
        _
      $region20: #{tpu_custom_call.1} parent=11 // pred_fallthru
        _
      // Predicated region
      $region21: #{tpu_custom_call.1} parent=11 // pred_check
        %p190 = pneg %p127
      $region22: #{tpu_custom_call.1} parent=11 // pred_check_branch
        %192 = sbr.rel (%p190) target = $region24
      $region23: #{tpu_custom_call.1} parent=11 // pred_region
        _
      $region24: #{tpu_custom_call.1} parent=11 // pred_fallthru
        _
      // Predicated region
      $region25: #{tpu_custom_call.1} parent=11 // pred_check
        %p193 = pneg %p148
      $region26: #{tpu_custom_call.1} parent=11 // pred_check_branch
        %195 = sbr.rel (%p193) target = $region28
      $region27: #{tpu_custom_call.1} parent=11 // pred_region
        _
      $region28: #{tpu_custom_call.1} parent=11 // pred_fallthru
        _
    $region12: #{tpu_custom_call.1} parent=5 // pred_fallthru
      _
    %p196 = scmp.lt.s32.totalorder %s12, 3
    // Predicated region
    $region29: #{tpu_custom_call.1} parent=5 // pred_check
      %p197 = pneg %p196
    $region30: #{tpu_custom_call.1} parent=5 // pred_check_branch
      %199 = sbr.rel (%p197) target = $region32
    $region31: #{tpu_custom_call.1} parent=5 // pred_region
      // Predicated region
      $region33: #{tpu_custom_call.1} parent=31 // pred_check
        %p200 = pneg %p32
      $region34: #{tpu_custom_call.1} parent=31 // pred_check_branch
        %202 = sbr.rel (%p200) target = $region36
      $region35: #{tpu_custom_call.1} parent=31 // pred_region
        %p203 = scmp.lt.s32.totalorder %s12, 2
        %s204 = scalar_select %p203, %s12, 2
        %s205 = smul.addr %s204, 4
        %s206 = smul.addr %s205, 2
        %s207 = scalar_lea.vmem %s0, %s206
      $region36: #{tpu_custom_call.1} parent=31 // pred_fallthru
        _
      // Predicated region
      $region37: #{tpu_custom_call.1} parent=31 // pred_check
        %p208 = pneg %p58
      $region38: #{tpu_custom_call.1} parent=31 // pred_check_branch
        %210 = sbr.rel (%p208) target = $region40
      $region39: #{tpu_custom_call.1} parent=31 // pred_region
        %p211 = scmp.lt.s32.totalorder %s12, 2
        %s212 = scalar_select %p211, %s12, 2
        %s213 = smul.addr %s212, 64
        %s214 = smul.addr %s213, 8
        %s215 = scalar_lea.vmem %s1, %s214
      $region40: #{tpu_custom_call.1} parent=31 // pred_fallthru
        _
    $region32: #{tpu_custom_call.1} parent=5 // pred_fallthru
      _
    %p216 = scmp.le.s32.totalorder 1, %s12
    %p217 = scmp.lt.s32.totalorder %s12, 4
    %p218 = pnand %p216, %p217
    %p219 = pneg %p218
    // Predicated region
    $region41: #{tpu_custom_call.1} parent=5 // pred_check
      _
    $region42: #{tpu_custom_call.1} parent=5 // pred_check_branch
      %221 = sbr.rel (%p218) target = $region44
    $region43: #{tpu_custom_call.1} parent=5 // pred_region
      %s222 = ssub.s32 %s12, 1
      %p223 = scmp.lt.s32.totalorder %s17, 2
      %s224 = scalar_select %p223, %s17, 2
      %s225 = smul.addr %s224, 4
      %s226 = smul.addr %s225, 2
      %s227 = scalar_lea.vmem %s0, %s226
      %p228 = pneg %p38
      %p229 = pneg %p35
      %p230 = scmp.lt.s32.totalorder %s17, 2
      %s231 = scalar_select %p230, %s17, 2
      %s232 = smul.addr %s231, 64
      %s233 = smul.addr %s232, 8
      %s234 = scalar_lea.vmem %s1, %s233
      %p235 = pneg %p64
      %p236 = pneg %p61
      %p237 = pneg %p85
      %p238 = pneg %p82
      %p239 = pneg %p106
      %p240 = pneg %p103
      %p241 = pneg %p127
      %p242 = pneg %p124
      %p243 = pneg %p148
      %p244 = pneg %p145
      %p245 = pneg %p169
      %p246 = pneg %p166
      %p247 = scmp.lt.s32.totalorder %s17, 2
      %s248 = scalar_select %p247, %s17, 2
      %s249 = smul.addr %s248, 4
      %s250 = smul.addr %s249, 2
      %s251 = scalar_lea.vmem %s0, %s250
      %p252 = scmp.lt.s32.totalorder %s17, 2
      %s253 = scalar_select %p252, %s17, 2
      %s254 = smul.addr %s253, 64
      %s255 = smul.addr %s254, 8
      %s256 = scalar_lea.vmem %s1, %s255
      %p258 = scmp.eq.s32.totalorder %s17, 0
      // Predicated region
      $region45: #{tpu_custom_call.1} parent=43 // pred_check
        %p259 = pneg %p258
      $region46: #{tpu_custom_call.1} parent=43 // pred_check_branch
        %261 = sbr.rel (%p259) target = $region48
      $region47: #{tpu_custom_call.1} parent=43 // pred_region
        %vm262 = vcmask 31744
        %263 = vst.msk [vmem:[#allocation2] sm:$0xff] %vm262, 0.0
        %264 = vst.msk [vmem:[#allocation2 + $0x8] sm:$0xff] %vm262, 0.0
        %265 = vst.msk [vmem:[#allocation2 + $0x10] sm:$0xff] %vm262, 0.0
        %266 = vst.msk [vmem:[#allocation2 + $0x18] sm:$0xff] %vm262, 0.0
      $region48: #{tpu_custom_call.1} parent=43 // pred_fallthru
        _
      %v267 = vld [vmem:[%s2] sm:$0xf]
      %v268 = vld [vmem:[%s2 + $0x4] sm:$0xf]
      %v269 = vld [vmem:[%s2 + $0x8] sm:$0xf]
      %v270 = vld [vmem:[%s2 + $0xc] sm:$0xf]
      %v271 = vld [vmem:[%s251] sm:$0xff]
      %v276 = vunpack.c.l.b16 %v267
      %v277 = vunpack.c.l.b16 %v268
      %v278 = vunpack.c.l.b16 %v269
      %v279 = vunpack.c.l.b16 %v270
      %v280 = vpack.c.b16 %v277, %v276
      %v281 = vpack.c.b16 %v279, %v278
      %v283 = vcombine.high %v271, %v271
      %v285 = vunpack.c.l.s4 1983009808
      %v286 = vunpack.c.0.s8 %v285
      %v287 = vlaneseq
      %v288 = vshrl.u32 %v287, 7
      %v289 = vsub.s32 %v286, %v288
      %v290 = vrot.slane %v271, %v289
      %v292 = vunpack.c.l.s4 1983009808
      %v293 = vunpack.c.0.s8 %v292
      %v294 = vlaneseq
      %v295 = vshrl.u32 %v294, 7
      %v296 = vsub.s32 %v293, %v295
      %v297 = vrot.slane %v283, %v296
      %v298 = vcombine.high %v290, %v290
      %v299 = vcombine.high %v297, %v297
      %vm300 = vcmask 31744
      %v302 = vsel %vm300, %v280, 0
      %v305 = vsel %vm300, %v281, 0
      %vm307 = vcmask 1041408
      %v309 = vsel %vm307, %v290, 0
      %v312 = vsel %vm307, %v298, 0
      %v315 = vsel %vm307, %v297, 0
      %v318 = vsel %vm307, %v299, 0
      %320 = vmatprep.subr.bf16.mxu0 0
      %321 = vmatpush1.bf16.msra.mxu0 0
      %322 = vmatprep.subr.bf16.mxu0 0
      %323 = vmatpush1.bf16.msra.mxu0 0
      %324 = vmatprep.subr.bf16.mxu0 0
      %325 = vmatpush1.bf16.msra.mxu0 0
      %326 = vmatprep.subr.bf16.mxu0 0
      %327 = vmatpush1.bf16.msra.mxu0 0
      %328 = vmatprep.subr.bf16.mxu0 0
      %329 = vmatpush1.bf16.msra.mxu0 0
      %330 = vmatprep.subr.bf16.mxu0 0
      %331 = vmatpush1.bf16.msra.mxu0 0
      %332 = vmatprep.subr.bf16.mxu0 0
      %333 = vmatpush1.bf16.msra.mxu0 0
      %334 = vmatprep.subr.bf16.mxu0 %v312
      %335 = vmatpush1.bf16.msra.mxu0 %v309
      %336 = vmatprep.subr.bf16.mxu0 0
      %337 = vmatpush2.bf16.msra.mxu0 0
      %338 = vmatprep.subr.bf16.mxu0 0
      %339 = vmatpush2.bf16.msra.mxu0 0
      %340 = vmatprep.subr.bf16.mxu0 0
      %341 = vmatpush2.bf16.msra.mxu0 0
      %342 = vmatprep.subr.bf16.mxu0 0
      %343 = vmatpush2.bf16.msra.mxu0 0
      %344 = vmatprep.subr.bf16.mxu0 0
      %345 = vmatpush2.bf16.msra.mxu0 0
      %346 = vmatprep.subr.bf16.mxu0 0
      %347 = vmatpush2.bf16.msra.mxu0 0
      %348 = vmatprep.subr.bf16.mxu0 0
      %349 = vmatpush2.bf16.msra.mxu0 0
      %350 = vmatprep.subr.bf16.mxu0 0
      %351 = vmatpush2.bf16.msra.mxu0 0
      %352 = vmatprep.mubr.bf16.mxu0 0
      %353 = vmatmul.mubr.bf16.gmra.mxu0 %v302
      %v354 = vpop.f32.mrf.mxu0
      %v355 = vadd.f32 0.0, %v354
      %v356 = vpop.f32.mrf.mxu0
      %v357 = vadd.f32 0.0, %v356
      %v358 = vpop.f32.mrf.mxu0
      %v359 = vadd.f32 0.0, %v358
      %v360 = vpop.f32.mrf.mxu0
      %v361 = vadd.f32 0.0, %v360
      %362 = vmatprep.mubr.bf16.mxu0 0
      %363 = vmatmul.mubr.bf16.gmra.mxu0 %v305
      %v364 = vpop.f32.mrf.mxu0
      %v365 = vadd.f32 0.0, %v364
      %v366 = vpop.f32.mrf.mxu0
      %v367 = vadd.f32 0.0, %v366
      %v368 = vpop.f32.mrf.mxu0
      %v369 = vadd.f32 0.0, %v368
      %v370 = vpop.f32.mrf.mxu0
      %v371 = vadd.f32 0.0, %v370
      %372 = vdwg.mxu0
      %373 = vmatprep.subr.bf16.mxu0 0
      %374 = vmatpush1.bf16.msra.mxu0 0
      %375 = vmatprep.subr.bf16.mxu0 0
      %376 = vmatpush1.bf16.msra.mxu0 0
      %377 = vmatprep.subr.bf16.mxu0 0
      %378 = vmatpush1.bf16.msra.mxu0 0
      %379 = vmatprep.subr.bf16.mxu0 0
      %380 = vmatpush1.bf16.msra.mxu0 0
      %381 = vmatprep.subr.bf16.mxu0 0
      %382 = vmatpush1.bf16.msra.mxu0 0
      %383 = vmatprep.subr.bf16.mxu0 0
      %384 = vmatpush1.bf16.msra.mxu0 0
      %385 = vmatprep.subr.bf16.mxu0 0
      %386 = vmatpush1.bf16.msra.mxu0 0
      %387 = vmatprep.subr.bf16.mxu0 %v318
      %388 = vmatpush1.bf16.msra.mxu0 %v315
      %389 = vmatprep.subr.bf16.mxu0 0
      %390 = vmatpush2.bf16.msra.mxu0 0
      %391 = vmatprep.subr.bf16.mxu0 0
      %392 = vmatpush2.bf16.msra.mxu0 0
      %393 = vmatprep.subr.bf16.mxu0 0
      %394 = vmatpush2.bf16.msra.mxu0 0
      %395 = vmatprep.subr.bf16.mxu0 0
      %396 = vmatpush2.bf16.msra.mxu0 0
      %397 = vmatprep.subr.bf16.mxu0 0
      %398 = vmatpush2.bf16.msra.mxu0 0
      %399 = vmatprep.subr.bf16.mxu0 0
      %400 = vmatpush2.bf16.msra.mxu0 0
      %401 = vmatprep.subr.bf16.mxu0 0
      %402 = vmatpush2.bf16.msra.mxu0 0
      %403 = vmatprep.subr.bf16.mxu0 0
      %404 = vmatpush2.bf16.msra.mxu0 0
      %405 = vmatprep.mubr.bf16.mxu0 0
      %406 = vmatmul.mubr.bf16.gmra.mxu0 %v302
      %v407 = vpop.f32.mrf.mxu0
      %v408 = vadd.f32 0.0, %v407
      %v409 = vpop.f32.mrf.mxu0
      %v410 = vadd.f32 0.0, %v409
      %v411 = vpop.f32.mrf.mxu0
      %v412 = vadd.f32 0.0, %v411
      %v413 = vpop.f32.mrf.mxu0
      %v414 = vadd.f32 0.0, %v413
      %415 = vmatprep.mubr.bf16.mxu0 0
      %416 = vmatmul.mubr.bf16.gmra.mxu0 %v305
      %v417 = vpop.f32.mrf.mxu0
      %v418 = vadd.f32 0.0, %v417
      %v419 = vpop.f32.mrf.mxu0
      %v420 = vadd.f32 0.0, %v419
      %v421 = vpop.f32.mrf.mxu0
      %v422 = vadd.f32 0.0, %v421
      %v423 = vpop.f32.mrf.mxu0
      %v424 = vadd.f32 0.0, %v423
      %425 = vdwg.mxu0
      %v426 = vmax.f32 %v355, 0.0
      %v427 = vmax.f32 %v357, 0.0
      %v428 = vmax.f32 %v408, 0.0
      %v429 = vmax.f32 %v410, 0.0
      %v430 = vmax.f32 %v359, 0.0
      %v431 = vmax.f32 %v361, 0.0
      %v432 = vmax.f32 %v412, 0.0
      %v433 = vmax.f32 %v414, 0.0
      %v434 = vmax.f32 %v365, 0.0
      %v435 = vmax.f32 %v367, 0.0
      %v436 = vmax.f32 %v418, 0.0
      %v437 = vmax.f32 %v420, 0.0
      %v438 = vmax.f32 %v369, 0.0
      %v439 = vmax.f32 %v371, 0.0
      %v440 = vmax.f32 %v422, 0.0
      %v441 = vmax.f32 %v424, 0.0
      %v442 = vld [vmem:[#allocation2] sm:$0xff]
      %v443 = vld [vmem:[#allocation2 + $0x8] sm:$0xff]
      %v444 = vld [vmem:[#allocation2 + $0x10] sm:$0xff]
      %v445 = vld [vmem:[#allocation2 + $0x18] sm:$0xff]
      %v446 = vld [vmem:[%s256] sm:$0xff]
      %v447 = vld [vmem:[%s256 + $0x8] sm:$0xff]
      %v448 = vld [vmem:[%s256 + $0x10] sm:$0xff]
      %v449 = vld [vmem:[%s256 + $0x18] sm:$0xff]
      %v450 = vld [vmem:[%s256 + $0x20] sm:$0xff]
      %v451 = vld [vmem:[%s256 + $0x28] sm:$0xff]
      %v452 = vld [vmem:[%s256 + $0x30] sm:$0xff]
      %v453 = vld [vmem:[%s256 + $0x38] sm:$0xff]
      %v454 = vld [vmem:[%s256 + $0x40] sm:$0xff]
      %v455 = vld [vmem:[%s256 + $0x48] sm:$0xff]
      %v456 = vld [vmem:[%s256 + $0x50] sm:$0xff]
      %v457 = vld [vmem:[%s256 + $0x58] sm:$0xff]
      %v458 = vld [vmem:[%s256 + $0x60] sm:$0xff]
      %v459 = vld [vmem:[%s256 + $0x68] sm:$0xff]
      %v460 = vld [vmem:[%s256 + $0x70] sm:$0xff]
      %v461 = vld [vmem:[%s256 + $0x78] sm:$0xff]
      %v462 = vld [vmem:[%s256 + $0x80] sm:$0xff]
      %v463 = vld [vmem:[%s256 + $0x88] sm:$0xff]
      %v464 = vld [vmem:[%s256 + $0x90] sm:$0xff]
      %v465 = vld [vmem:[%s256 + $0x98] sm:$0xff]
      %v466 = vld [vmem:[%s256 + $0xa0] sm:$0xff]
      %v467 = vld [vmem:[%s256 + $0xa8] sm:$0xff]
      %v468 = vld [vmem:[%s256 + $0xb0] sm:$0xff]
      %v469 = vld [vmem:[%s256 + $0xb8] sm:$0xff]
      %v470 = vld [vmem:[%s256 + $0xc0] sm:$0xff]
      %v471 = vld [vmem:[%s256 + $0xc8] sm:$0xff]
      %v472 = vld [vmem:[%s256 + $0xd0] sm:$0xff]
      %v473 = vld [vmem:[%s256 + $0xd8] sm:$0xff]
      %v474 = vld [vmem:[%s256 + $0xe0] sm:$0xff]
      %v475 = vld [vmem:[%s256 + $0xe8] sm:$0xff]
      %v476 = vld [vmem:[%s256 + $0xf0] sm:$0xff]
      %v477 = vld [vmem:[%s256 + $0xf8] sm:$0xff]
      %v478 = vld [vmem:[%s256 + $0x100] sm:$0xff]
      %v479 = vld [vmem:[%s256 + $0x108] sm:$0xff]
      %v480 = vld [vmem:[%s256 + $0x110] sm:$0xff]
      %v481 = vld [vmem:[%s256 + $0x118] sm:$0xff]
      %v482 = vld [vmem:[%s256 + $0x120] sm:$0xff]
      %v483 = vld [vmem:[%s256 + $0x128] sm:$0xff]
      %v484 = vld [vmem:[%s256 + $0x130] sm:$0xff]
      %v485 = vld [vmem:[%s256 + $0x138] sm:$0xff]
      %v486 = vld [vmem:[%s256 + $0x140] sm:$0xff]
      %v487 = vld [vmem:[%s256 + $0x148] sm:$0xff]
      %v488 = vld [vmem:[%s256 + $0x150] sm:$0xff]
      %v489 = vld [vmem:[%s256 + $0x158] sm:$0xff]
      %v490 = vld [vmem:[%s256 + $0x160] sm:$0xff]
      %v491 = vld [vmem:[%s256 + $0x168] sm:$0xff]
      %v492 = vld [vmem:[%s256 + $0x170] sm:$0xff]
      %v493 = vld [vmem:[%s256 + $0x178] sm:$0xff]
      %v494 = vld [vmem:[%s256 + $0x180] sm:$0xff]
      %v495 = vld [vmem:[%s256 + $0x188] sm:$0xff]
      %v496 = vld [vmem:[%s256 + $0x190] sm:$0xff]
      %v497 = vld [vmem:[%s256 + $0x198] sm:$0xff]
      %v498 = vld [vmem:[%s256 + $0x1a0] sm:$0xff]
      %v499 = vld [vmem:[%s256 + $0x1a8] sm:$0xff]
      %v500 = vld [vmem:[%s256 + $0x1b0] sm:$0xff]
      %v501 = vld [vmem:[%s256 + $0x1b8] sm:$0xff]
      %v502 = vld [vmem:[%s256 + $0x1c0] sm:$0xff]
      %v503 = vld [vmem:[%s256 + $0x1c8] sm:$0xff]
      %v504 = vld [vmem:[%s256 + $0x1d0] sm:$0xff]
      %v505 = vld [vmem:[%s256 + $0x1d8] sm:$0xff]
      %v506 = vld [vmem:[%s256 + $0x1e0] sm:$0xff]
      %v507 = vld [vmem:[%s256 + $0x1e8] sm:$0xff]
      %v508 = vld [vmem:[%s256 + $0x1f0] sm:$0xff]
      %v509 = vld [vmem:[%s256 + $0x1f8] sm:$0xff]
      %510 = vmatprep.subr.mxu0 0.0
      %511 = vmatpush1.msra.mxu0 %v461
      %512 = vmatprep.subr.mxu0 0.0
      %513 = vmatpush1.msra.mxu0 %v460
      %514 = vmatprep.subr.mxu0 0.0
      %515 = vmatpush1.msra.mxu0 %v459
      %516 = vmatprep.subr.mxu0 0.0
      %517 = vmatpush1.msra.mxu0 %v458
      %518 = vmatprep.subr.mxu0 0.0
      %519 = vmatpush1.msra.mxu0 %v457
      %520 = vmatprep.subr.mxu0 0.0
      %521 = vmatpush1.msra.mxu0 %v456
      %522 = vmatprep.subr.mxu0 0.0
      %523 = vmatpush1.msra.mxu0 %v455
      %524 = vmatprep.subr.mxu0 0.0
      %525 = vmatpush1.msra.mxu0 %v454
      %526 = vmatprep.subr.mxu0 0.0
      %527 = vmatpush1.msra.mxu0 %v453
      %528 = vmatprep.subr.mxu0 0.0
      %529 = vmatpush1.msra.mxu0 %v452
      %530 = vmatprep.subr.mxu0 0.0
      %531 = vmatpush1.msra.mxu0 %v451
      %532 = vmatprep.subr.mxu0 0.0
      %533 = vmatpush1.msra.mxu0 %v450
      %534 = vmatprep.subr.mxu0 0.0
      %535 = vmatpush1.msra.mxu0 %v449
      %536 = vmatprep.subr.mxu0 0.0
      %537 = vmatpush1.msra.mxu0 %v448
      %538 = vmatprep.subr.mxu0 0.0
      %539 = vmatpush1.msra.mxu0 %v447
      %540 = vmatprep.subr.mxu0 0.0
      %541 = vmatpush1.msra.mxu0 %v446
      %542 = vmatprep.subr.mxu0 0.0
      %543 = vmatpush2.msra.mxu0 %v477
      %544 = vmatprep.subr.mxu0 0.0
      %545 = vmatpush2.msra.mxu0 %v476
      %546 = vmatprep.subr.mxu0 0.0
      %547 = vmatpush2.msra.mxu0 %v475
      %548 = vmatprep.subr.mxu0 0.0
      %549 = vmatpush2.msra.mxu0 %v474
      %550 = vmatprep.subr.mxu0 0.0
      %551 = vmatpush2.msra.mxu0 %v473
      %552 = vmatprep.subr.mxu0 0.0
      %553 = vmatpush2.msra.mxu0 %v472
      %554 = vmatprep.subr.mxu0 0.0
      %555 = vmatpush2.msra.mxu0 %v471
      %556 = vmatprep.subr.mxu0 0.0
      %557 = vmatpush2.msra.mxu0 %v470
      %558 = vmatprep.subr.mxu0 0.0
      %559 = vmatpush2.msra.mxu0 %v469
      %560 = vmatprep.subr.mxu0 0.0
      %561 = vmatpush2.msra.mxu0 %v468
      %562 = vmatprep.subr.mxu0 0.0
      %563 = vmatpush2.msra.mxu0 %v467
      %564 = vmatprep.subr.mxu0 0.0
      %565 = vmatpush2.msra.mxu0 %v466
      %566 = vmatprep.subr.mxu0 0.0
      %567 = vmatpush2.msra.mxu0 %v465
      %568 = vmatprep.subr.mxu0 0.0
      %569 = vmatpush2.msra.mxu0 %v464
      %570 = vmatprep.subr.mxu0 0.0
      %571 = vmatpush2.msra.mxu0 %v463
      %572 = vmatprep.subr.mxu0 0.0
      %573 = vmatpush2.msra.mxu0 %v462
      %574 = vmatprep.mubr.f32.mxu0 %v427
      %575 = vmatmul.mubr.f32.gmra.mxu0 %v426
      %v576 = vpop.f32.mrf.mxu0
      %v577 = vadd.f32 0.0, %v576
      %v578 = vpop.f32.mrf.mxu0
      %579 = vmatprep.mubr.f32.mxu0 %v431
      %580 = vmatmul.mubr.f32.gmra.mxu0 %v430
      %v581 = vpop.f32.mrf.mxu0
      %v582 = vadd.f32 0.0, %v581
      %v583 = vpop.f32.mrf.mxu0
      %584 = vmatprep.mubr.f32.mxu0 %v435
      %585 = vmatmul.mubr.f32.gmra.mxu0 %v434
      %v586 = vpop.f32.mrf.mxu0
      %v587 = vadd.f32 0.0, %v586
      %v588 = vpop.f32.mrf.mxu0
      %589 = vmatprep.mubr.f32.mxu0 %v439
      %590 = vmatmul.mubr.f32.gmra.mxu0 %v438
      %v591 = vpop.f32.mrf.mxu0
      %v592 = vadd.f32 0.0, %v591
      %v593 = vpop.f32.mrf.mxu0
      %594 = vdwg.mxu0
      %595 = vmatprep.subr.mxu0 0.0
      %596 = vmatpush1.msra.mxu0 %v493
      %597 = vmatprep.subr.mxu0 0.0
      %598 = vmatpush1.msra.mxu0 %v492
      %599 = vmatprep.subr.mxu0 0.0
      %600 = vmatpush1.msra.mxu0 %v491
      %601 = vmatprep.subr.mxu0 0.0
      %602 = vmatpush1.msra.mxu0 %v490
      %603 = vmatprep.subr.mxu0 0.0
      %604 = vmatpush1.msra.mxu0 %v489
      %605 = vmatprep.subr.mxu0 0.0
      %606 = vmatpush1.msra.mxu0 %v488
      %607 = vmatprep.subr.mxu0 0.0
      %608 = vmatpush1.msra.mxu0 %v487
      %609 = vmatprep.subr.mxu0 0.0
      %610 = vmatpush1.msra.mxu0 %v486
      %611 = vmatprep.subr.mxu0 0.0
      %612 = vmatpush1.msra.mxu0 %v485
      %613 = vmatprep.subr.mxu0 0.0
      %614 = vmatpush1.msra.mxu0 %v484
      %615 = vmatprep.subr.mxu0 0.0
      %616 = vmatpush1.msra.mxu0 %v483
      %617 = vmatprep.subr.mxu0 0.0
      %618 = vmatpush1.msra.mxu0 %v482
      %619 = vmatprep.subr.mxu0 0.0
      %620 = vmatpush1.msra.mxu0 %v481
      %621 = vmatprep.subr.mxu0 0.0
      %622 = vmatpush1.msra.mxu0 %v480
      %623 = vmatprep.subr.mxu0 0.0
      %624 = vmatpush1.msra.mxu0 %v479
      %625 = vmatprep.subr.mxu0 0.0
      %626 = vmatpush1.msra.mxu0 %v478
      %627 = vmatprep.subr.mxu0 0.0
      %628 = vmatpush2.msra.mxu0 %v509
      %629 = vmatprep.subr.mxu0 0.0
      %630 = vmatpush2.msra.mxu0 %v508
      %631 = vmatprep.subr.mxu0 0.0
      %632 = vmatpush2.msra.mxu0 %v507
      %633 = vmatprep.subr.mxu0 0.0
      %634 = vmatpush2.msra.mxu0 %v506
      %635 = vmatprep.subr.mxu0 0.0
      %636 = vmatpush2.msra.mxu0 %v505
      %637 = vmatprep.subr.mxu0 0.0
      %638 = vmatpush2.msra.mxu0 %v504
      %639 = vmatprep.subr.mxu0 0.0
      %640 = vmatpush2.msra.mxu0 %v503
      %641 = vmatprep.subr.mxu0 0.0
      %642 = vmatpush2.msra.mxu0 %v502
      %643 = vmatprep.subr.mxu0 0.0
      %644 = vmatpush2.msra.mxu0 %v501
      %645 = vmatprep.subr.mxu0 0.0
      %646 = vmatpush2.msra.mxu0 %v500
      %647 = vmatprep.subr.mxu0 0.0
      %648 = vmatpush2.msra.mxu0 %v499
      %649 = vmatprep.subr.mxu0 0.0
      %650 = vmatpush2.msra.mxu0 %v498
      %651 = vmatprep.subr.mxu0 0.0
      %652 = vmatpush2.msra.mxu0 %v497
      %653 = vmatprep.subr.mxu0 0.0
      %654 = vmatpush2.msra.mxu0 %v496
      %655 = vmatprep.subr.mxu0 0.0
      %656 = vmatpush2.msra.mxu0 %v495
      %657 = vmatprep.subr.mxu0 0.0
      %658 = vmatpush2.msra.mxu0 %v494
      %659 = vmatprep.mubr.f32.mxu0 %v429
      %660 = vmatmul.mubr.f32.gmra.mxu0 %v428
      %v661 = vpop.f32.mrf.mxu0
      %v662 = vadd.f32 %v577, %v661
      %v663 = vpop.f32.mrf.mxu0
      %664 = vmatprep.mubr.f32.mxu0 %v433
      %665 = vmatmul.mubr.f32.gmra.mxu0 %v432
      %v666 = vpop.f32.mrf.mxu0
      %v667 = vadd.f32 %v582, %v666
      %v668 = vpop.f32.mrf.mxu0
      %669 = vmatprep.mubr.f32.mxu0 %v437
      %670 = vmatmul.mubr.f32.gmra.mxu0 %v436
      %v671 = vpop.f32.mrf.mxu0
      %v672 = vadd.f32 %v587, %v671
      %v673 = vpop.f32.mrf.mxu0
      %674 = vmatprep.mubr.f32.mxu0 %v441
      %675 = vmatmul.mubr.f32.gmra.mxu0 %v440
      %v676 = vpop.f32.mrf.mxu0
      %v677 = vadd.f32 %v592, %v676
      %v678 = vpop.f32.mrf.mxu0
      %679 = vdwg.mxu0
      %v680 = vadd.f32 %v442, %v662
      %v681 = vadd.f32 %v443, %v667
      %v682 = vadd.f32 %v444, %v672
      %v683 = vadd.f32 %v445, %v677
      %684 = vst.msk [vmem:[#allocation2] sm:$0xff] %vm300, %v680
      %685 = vst.msk [vmem:[#allocation2 + $0x8] sm:$0xff] %vm300, %v681
      %686 = vst.msk [vmem:[#allocation2 + $0x10] sm:$0xff] %vm300, %v682
      %687 = vst.msk [vmem:[#allocation2 + $0x18] sm:$0xff] %vm300, %v683
      %p688 = scmp.eq.s32.totalorder %s17, 2
      // Predicated region
      $region49: #{tpu_custom_call.1} parent=43 // pred_check
        %p689 = pneg %p688
      $region50: #{tpu_custom_call.1} parent=43 // pred_check_branch
        %691 = sbr.rel (%p689) target = $region52
      $region51: #{tpu_custom_call.1} parent=43 // pred_region
        %v692 = vld [vmem:[#allocation2] sm:$0xff]
        %v693 = vld [vmem:[#allocation2 + $0x8] sm:$0xff]
        %v694 = vld [vmem:[#allocation2 + $0x10] sm:$0xff]
        %v695 = vld [vmem:[#allocation2 + $0x18] sm:$0xff]
        %v696 = vmul.f32 %v692, 0.0034722222
        %v697 = vmul.f32 %v693, 0.0034722222
        %v698 = vmul.f32 %v694, 0.0034722222
        %v699 = vmul.f32 %v695, 0.0034722222
        %v700 = vld [vmem:[%s3] sm:$0xf]
        %v701 = vpack.c.bf16 %v697, %v696
        %v702 = vpack.c.bf16 %v699, %v698
        %vm703 = vcmask 261120
        %v705 = vsel %vm703, %v700, 0
        %707 = vmatprep.subr.bf16.mxu0 0
        %708 = vmatpush1.bf16.msra.mxu0 0
        %709 = vmatprep.subr.bf16.mxu0 0
        %710 = vmatpush1.bf16.msra.mxu0 0
        %711 = vmatprep.subr.bf16.mxu0 0
        %712 = vmatpush1.bf16.msra.mxu0 0
        %713 = vmatprep.subr.bf16.mxu0 0
        %714 = vmatpush1.bf16.msra.mxu0 0
        %715 = vmatprep.subr.bf16.mxu0 0
        %716 = vmatpush1.bf16.msra.mxu0 0
        %717 = vmatprep.subr.bf16.mxu0 0
        %718 = vmatpush1.bf16.msra.mxu0 0
        %719 = vmatprep.subr.bf16.mxu0 0
        %720 = vmatpush1.bf16.msra.mxu0 %v702
        %721 = vmatprep.subr.bf16.mxu0 0
        %722 = vmatpush1.bf16.msra.mxu0 %v701
        %723 = vmatprep.subr.bf16.mxu0 0
        %724 = vmatpush2.bf16.msra.mxu0 0
        %725 = vmatprep.subr.bf16.mxu0 0
        %726 = vmatpush2.bf16.msra.mxu0 0
        %727 = vmatprep.subr.bf16.mxu0 0
        %728 = vmatpush2.bf16.msra.mxu0 0
        %729 = vmatprep.subr.bf16.mxu0 0
        %730 = vmatpush2.bf16.msra.mxu0 0
        %731 = vmatprep.subr.bf16.mxu0 0
        %732 = vmatpush2.bf16.msra.mxu0 0
        %733 = vmatprep.subr.bf16.mxu0 0
        %734 = vmatpush2.bf16.msra.mxu0 0
        %735 = vmatprep.subr.bf16.mxu0 0
        %736 = vmatpush2.bf16.msra.mxu0 0
        %737 = vmatprep.subr.bf16.mxu0 0
        %738 = vmatpush2.bf16.msra.mxu0 0
        %739 = vmatprep.mubr.bf16.mxu0 0
        %740 = vmatmul.mubr.bf16.gmra.mxu0 %v705
        %v741 = vpop.f32.mrf.mxu0
        %v742 = vadd.f32 0.0, %v741
        %v743 = vpop.f32.mrf.mxu0
        %v744 = vpop.f32.mrf.mxu0
        %v745 = vpop.f32.mrf.mxu0
        %746 = vdwg.mxu0
        %v747 = vsel %vm300, %v742, 0.0
        %748 = vadd.xlane.f32.xlu0 %v747
        %v749 = vpop.xlane.xlu0 %748
        %v750 = vrcp.pop 4.0
        %v751 = vmul.f32 %v749, %v750
        %v752 = vsub.f32 %v742, %v751
        %v753 = vmul.f32 %v752, %v752
        %v754 = vsel %vm300, %v753, 0.0
        %755 = vadd.xlane.f32.xlu0 %v754
        %v756 = vpop.xlane.xlu0 %755
        %v757 = vmul.f32 %v756, %v750
        %v758 = vld [vmem:[%s4] sm:$0xff]
        %v759 = vadd.f32 %v757, 1e-05
        %v760 = vrsqrt.pop %v759
        %v761 = vmul.f32 %v758, %v760
        %763 = vset.pattern.permute.xlu0 0
        %764 = vperm.xlu0 %763, %v761
        %v765 = vpop.permute.xlu0 %764
        %v767 = vmul.f32 %v752, %v765
        %v768 = vld [vmem:[%s5] sm:$0xff]
        %770 = vset.pattern.permute.xlu0 0
        %771 = vperm.xlu0 %770, %v768
        %v772 = vpop.permute.xlu0 %771
        %v774 = vadd.f32 %v767, %v772
        %775 = vst.msk [vmem:[%s6] sm:$0xff] %vm300, %v774
      $region52: #{tpu_custom_call.1} parent=43 // pred_fallthru
        _
      // Predicated region
      $region53: #{tpu_custom_call.1} parent=43 // pred_check
        %p776 = pneg %p166
      $region54: #{tpu_custom_call.1} parent=43 // pred_check_branch
        %778 = sbr.rel (%p776) target = $region56
      $region55: #{tpu_custom_call.1} parent=43 // pred_region
        _
      $region56: #{tpu_custom_call.1} parent=43 // pred_fallthru
        _
      // Predicated region
      $region57: #{tpu_custom_call.1} parent=43 // pred_check
        %p779 = pneg %p166
      $region58: #{tpu_custom_call.1} parent=43 // pred_check_branch
        %781 = sbr.rel (%p779) target = $region60
      $region59: #{tpu_custom_call.1} parent=43 // pred_region
        _
      $region60: #{tpu_custom_call.1} parent=43 // pred_fallthru
        _
    $region44: #{tpu_custom_call.1} parent=5 // pred_fallthru
      _
    %p782 = scmp.le.s32.totalorder 2, %s12
    // Predicated region
    $region61: #{tpu_custom_call.1} parent=5 // pred_check
      %p783 = pneg %p782
    $region62: #{tpu_custom_call.1} parent=5 // pred_check_branch
      %785 = sbr.rel (%p783) target = $region64
    $region63: #{tpu_custom_call.1} parent=5 // pred_region
      %s786 = ssub.s32 %s12, 2
    $region64: #{tpu_custom_call.1} parent=5 // pred_fallthru
      _
  $region6: #{tpu_custom_call.1} parent=0 // loop_footer
    %s16 = sadd.s32 1, %s12
  $region7: #{tpu_custom_call.1} parent=0 // loop_footer_branch
    %11 = sbr.rel target = $region3
  $region8: #{tpu_custom_call.1} parent=0 // loop_exit
    _

</llo_original>
